<compile_context>
chip_gen: v7x
topology: tpu7x:2x2x1
jax: 0.10.0
libtpu: 0.0.40
codegen_flags: <defaults>
</compile_context>

<pallas_src>
import jax
import jax.numpy as jnp
from jax.experimental import pallas as pl
from jax.experimental.pallas import tpu as pltpu


_SINGLE_BLOCK_MAX_BYTES = 1 << 20   # <= 1 MiB: whole array as one block, no grid
_TARGET_BLOCK_BYTES = 2 << 20       # ~2 MiB tiles: past the HBM-roofline knee on
                                    # v5e/v6e, and small enough that double-buffered
                                    # in+out (~8 MiB) fits every chip's scoped VMEM.


def _sigmoid_kernel(x_ref, o_ref):
    x = x_ref[...]
    if jnp.dtype(o_ref.dtype).itemsize >= 4:
        # f32 I/O: exact sigmoid (EUP exp + divide).  HBM binds first, so the
        # extra VALU work is free filler; keeps full f32 accuracy.
        o_ref[...] = jax.nn.sigmoid(x.astype(jnp.float32)).astype(o_ref.dtype)
    else:
        # Sub-32-bit I/O (bf16/fp16): at v7x bandwidth the single EUP is the
        # first slot to saturate, so use the cheap approx reciprocal.  The f32
        # intermediate error is far below one bf16 ulp.
        xf = x.astype(jnp.float32)
        o_ref[...] = pl.reciprocal(jnp.exp(-xf) + 1.0, approx=True).astype(o_ref.dtype)


def _pick_lanes(n):
    # Prefer a wide, lane-dense last dim (unmasked vst); 128 is the minimum.
    for lanes in (1024, 512, 256, 128):
        if n % lanes == 0:
            return lanes
    return 128


def neural_network_forward(x):
    """NeuralNetwork forward pass: y = sigmoid(x). Any shape, any float dtype."""
    orig_shape = x.shape
    dtype = x.dtype
    n = x.size
    itemsize = jnp.dtype(dtype).itemsize

    if n == 0:
        return x

    ragged = (n % 128) != 0
    if ragged:
        # Ragged tail: pad the flattened array only up to the next lane multiple
        # (<= 127 elements) — never to a full block multiple.  The trailing [:n]
        # slice below is the one extra pass, taken only on this edge-case path.
        lanes = 128
        n_lane = pl.cdiv(n, lanes) * lanes
        x2d = jnp.pad(jnp.ravel(x), (0, n_lane - n)).reshape(n_lane // lanes, lanes)
    else:
        lanes = _pick_lanes(n)
        # Contiguous reshape -> bitcast, no HBM copy.
        x2d = jnp.reshape(x, (n // lanes, lanes))
    rows = x2d.shape[0]

    if rows * lanes * itemsize <= _SINGLE_BLOCK_MAX_BYTES:
        # ---------- Small path: single whole-array block, no grid ----------
        y2d = pl.pallas_call(
            _sigmoid_kernel,
            out_shape=jax.ShapeDtypeStruct((rows, lanes), dtype),
        )(x2d)
    else:
        # ---------- Tiled path: lane-dense slab, ~2 MiB blocks, parallel grid ----------
        tile_rows = max(32, (_TARGET_BLOCK_BYTES // (lanes * itemsize)) // 32 * 32)
        # Guarantee >= 2 grid steps so both v7x TensorCores get a shard.
        half_rows = ((pl.cdiv(rows, 2) + 31) // 32) * 32
        tile_rows = min(tile_rows, half_rows)
        num_blocks = pl.cdiv(rows, tile_rows)   # partial last block is masked by Pallas

        y2d = pl.pallas_call(
            _sigmoid_kernel,
            out_shape=jax.ShapeDtypeStruct((rows, lanes), dtype),
            grid=(num_blocks,),
            in_specs=[pl.BlockSpec((tile_rows, lanes), lambda i: (i, 0))],
            out_specs=pl.BlockSpec((tile_rows, lanes), lambda i: (i, 0)),
            # "parallel" lets the grid shard across v7x's two TensorCores; if a
            # future Mosaic version stops sharding 1-D parallel grids, switch to
            # pltpu.CORE_PARALLEL here.
            compiler_params=pltpu.CompilerParams(
                dimension_semantics=("parallel",)),
        )(x2d)

    if ragged:
        return jnp.reshape(y2d.reshape(-1)[:n], orig_shape)
    return jnp.reshape(y2d, orig_shape)


if __name__ == "__main__":
    key = jax.random.PRNGKey(0)
    # Small NCHW input consistent with the generic nn.Module forward.
    x = jax.random.normal(key, (2, 4, 16, 16), dtype=jnp.float32)

    y = neural_network_forward(x)
    y = jax.block_until_ready(y)

    # Reference check: PyTorch semantics are y = sigmoid(x).
    y_ref = jax.nn.sigmoid(x)
    assert y.shape == x.shape
    assert jnp.allclose(y, y_ref, atol=1e-6), "mismatch vs reference"

    print("KERNEL_OK")
</pallas_src>

<mosaic_0001>
module attributes {stable_mosaic.version = 11 : i64} {
  func.func @_sigmoid_kernel(%arg0: memref<2x1024xf32, #tpu.memory_space<vmem>>, %arg1: memref<2x1024xf32, #tpu.memory_space<vmem>>) attributes {dimension_semantics = [], scalar_prefetch = 0 : i64, scratch_operands = 0 : i64, tpu.core_type = #tpu.core_type<tc>} {
    %c0 = arith.constant 0 : index
    %c0_0 = arith.constant 0 : index
    %0 = vector.load %arg0[%c0, %c0_0] : memref<2x1024xf32, #tpu.memory_space<vmem>>, vector<2x1024xf32>
    %1 = arith.negf %0 : vector<2x1024xf32>
    %2 = math.exp %1 : vector<2x1024xf32>
    %cst = arith.constant 1.000000e+00 : f32
    %3 = vector.broadcast %cst : f32 to vector<2x1024xf32>
    %4 = arith.addf %3, %2 : vector<2x1024xf32>
    %5 = arith.divf %3, %4 : vector<2x1024xf32>
    %c0_1 = arith.constant 0 : index
    %c0_2 = arith.constant 0 : index
    %6 = vector.load %arg1[%c0_1, %c0_2] : memref<2x1024xf32, #tpu.memory_space<vmem>>, vector<2x1024xf32>
    tpu.vector_store %arg1[%c0_1, %c0_2], %5 {strides = array<i32>} : memref<2x1024xf32, #tpu.memory_space<vmem>>, vector<2x1024xf32>,
    return
  }
}

</mosaic_0001>

<llo_original>
// kernel: tpu_custom_call.1
$region0: #{tpu_custom_call.1}
  #allocation0 [shape = 'u32[]', space=smem, size = 0x4, offset = 0x4, fixed_abs, tag = 'smem constant byte address 0x4 - core index']
  #allocation1 [shape = 'u32[144,128]{1,0:T(1,128)}', space=vmem, size = 0x12000, scoped, tag = 'internal scratch']
  %s0 = inlined_call_operand.hbm [shape: f32[2,1024], index: 0, kind: input, shape index: {}]
  %s1 = inlined_call_operand.hbm [shape: f32[2,1024], index: 1, kind: output, shape index: {}]
  %s2 = sld [smem:[#allocation0]]
  $region18: #{tpu_custom_call.1} parent=0
    _
  %s4 = ssub.s32 1, %s2
  %s5 = scalar_select 0, %s4, %s2
  $region1: #{tpu_custom_call.1} parent=0
    #allocation2 [shape = 'u8[8192]{0}', space=vmem, size = 0x2000, scoped, tag = 'input window, operand 0, single buffered']
    #allocation3 [shape = 's32[1]{0}', space=sflag, size = 0x4, scoped, tag = 'scoped memory for tpu_custom_call.1']
    #allocation4 [shape = 's32[1]{0}', space=sflag, size = 0x4, scoped, tag = 'scoped memory for tpu_custom_call.1']
    #allocation5 [shape = 'u8[8192]{0}', space=vmem, size = 0x2000, scoped, tag = 'output window, operand 0, single buffered']
    %6 = vsyncpa [#allocation3], 0
    %7 = vsyncpa [#allocation4], 0
    // Predicated region
    $region2: #{tpu_custom_call.1} parent=1 // pred_check
      _
    $region3: #{tpu_custom_call.1} parent=1 // pred_check_branch
      %9 = sbr.rel (0) target = $region5
    $region4: #{tpu_custom_call.1} parent=1 // pred_region
      %s11 = ssub.s32 256, 256
      %12 = vsyncadd [#allocation3], %s11
      %s14 = sshll.u32 [#allocation2], 4
      %s15 = int_to_ptr.vmem [resolvable:$true] %s14
      %17 = dma.hbm_to_vmem [thread:$0]  %s0, 256, %s15, [#allocation3]
    $region5: #{tpu_custom_call.1} parent=1 // pred_fallthru
      _
    // Predicated region
    $region6: #{tpu_custom_call.1} parent=1 // pred_check
      _
    $region7: #{tpu_custom_call.1} parent=1 // pred_check_branch
      %19 = sbr.rel (0) target = $region9
    $region8: #{tpu_custom_call.1} parent=1 // pred_region
      %20 = dma.done [#allocation3], 256
    $region9: #{tpu_custom_call.1} parent=1 // pred_fallthru
      _
    %v21 = vld [vmem:[#allocation2] sm:$0xff]
    %v22 = vld [vmem:[#allocation2 + $0x8] sm:$0xff]
    %v23 = vxor.u32 %v21, 2147483648
    %v24 = vxor.u32 %v22, 2147483648
    %v25 = vmul.f32 %v23, 1.442695
    %v26 = vpow.pop %v25
    %v27 = vmul.f32 %v24, 1.442695
    %v28 = vpow.pop %v27
    %v29 = vadd.f32 %v26, 1.0
    %v30 = vadd.f32 %v28, 1.0
    %v31 = vrcp.pop %v29
    %v32 = vmul.f32 1.0, %v31
    %v33 = vrcp.pop %v30
    %v34 = vmul.f32 1.0, %v33
    %35 = vst [vmem:[#allocation5] sm:$0xff] %v32
    %36 = vst [vmem:[#allocation5 + $0x8] sm:$0xff] %v34
    // Predicated region
    $region10: #{tpu_custom_call.1} parent=1 // pred_check
      _
    $region11: #{tpu_custom_call.1} parent=1 // pred_check_branch
      %38 = sbr.rel (0) target = $region13
    $region12: #{tpu_custom_call.1} parent=1 // pred_region
      %s40 = ssub.s32 256, 256
      %41 = vsyncadd [#allocation4], %s40
      %s43 = sshll.u32 [#allocation5], 4
      %s44 = int_to_ptr.vmem [resolvable:$true] %s43
      %46 = dma.vmem_to_hbm [thread:$0]  %s44, 256, %s1, [#allocation4]
    $region13: #{tpu_custom_call.1} parent=1 // pred_fallthru
      _
    // Predicated region
    $region14: #{tpu_custom_call.1} parent=1 // pred_check
      _
    $region15: #{tpu_custom_call.1} parent=1 // pred_check_branch
      %48 = sbr.rel (0) target = $region17
    $region16: #{tpu_custom_call.1} parent=1 // pred_region
      %49 = dma.done [#allocation4], 256
    $region17: #{tpu_custom_call.1} parent=1 // pred_fallthru
      _
    %50 = vsyncpa [#allocation3], 1
    %51 = vsyncpa [#allocation4], 1

</llo_original>
